<compile_context>
chip_gen: v7x
topology: tpu7x:2x2x1
jax: 0.10.0
libtpu: 0.0.40
codegen_flags: <defaults>
</compile_context>

<pallas_src>
import functools

import numpy as np
import jax
import jax.numpy as jnp
from jax import lax
from jax.experimental import pallas as pl
from jax.experimental.pallas import tpu as pltpu

EPS = 1e-5
_LANES = 128
_MAX_TILE_ROWS = 16384


# ----------------------------- helpers (static) -----------------------------
def _round_up(x, m):
    return ((x + m - 1) // m) * m


def _cdiv(a, b):
    return -(-a // b)


@functools.lru_cache(maxsize=None)
def _vmem_limit_bytes():
    """Per-generation scoped-VMEM request: half of physical VMEM, capped at 64 MiB."""
    try:
        cap = int(pltpu.get_tpu_info().vmem_capacity_bytes)
    except Exception:
        cap = 64 * 1024 * 1024          # conservative fallback: assume v7x (64 MiB VMEM)
    return max(16 * 1024 * 1024, min(cap // 2, 64 * 1024 * 1024))


def _layout(D):
    """(pack, W): pack logical rows per 128-lane line, W = lane-dense width."""
    if D <= _LANES and _LANES % D == 0:
        return _LANES // D, _LANES       # e.g. D=32 -> 4 rows per lane line
    return 1, _round_up(D, _LANES)       # pad features up to a lane multiple


def _tile_rows(Np, W, itemsize, vmem_limit, cap_rows=None):
    sub = {4: 8, 2: 16, 1: 32}.get(itemsize, 8)
    # ~4 MiB blocks on v7x (32 MiB scoped limit), ~8 MiB on v5e/v6e (64 MiB limit);
    # double-buffered in+out stays well inside the requested scoped VMEM.
    cap_bytes = max(512 * 1024, vmem_limit // 8)
    max_rows = max(sub, min(_MAX_TILE_ROWS, (cap_bytes // (W * 4)) // sub * sub))
    if cap_rows is not None:
        max_rows = max(sub, min(max_rows, _round_up(cap_rows, sub)))
    k = _cdiv(Np, max_rows)                   # number of row tiles
    return _round_up(_cdiv(Np, k), sub)       # balanced tile height


def _pack_input(x, pack, W, tm):
    """Zero-pad rows/cols and view [N, D] as [Np_pad, W] (lane-dense)."""
    N, D = x.shape
    Np_pad = _round_up(_cdiv(N, pack), tm)
    N_pad = Np_pad * pack
    pad_rows = N_pad - N
    pad_cols = W // pack - D                  # nonzero only when pack == 1 and D % 128 != 0
    if pad_rows or pad_cols:
        x = jnp.pad(x, ((0, pad_rows), (0, pad_cols)))
    return x.reshape(Np_pad, W)


def _unpack_output(out, N, D, pack):
    Np_pad, W = out.shape
    return out.reshape(Np_pad * pack, W // pack)[:N, :D]


def _rep_param(p, pack, W):
    """[D] parameter -> lane-dense [1, W] (lane l holds param[l % D], zero-padded)."""
    p = p.astype(jnp.float32)
    cols = W // pack
    if cols != p.shape[0]:
        p = jnp.pad(p, (0, cols - p.shape[0]))
    if pack > 1:
        p = jnp.tile(p, pack)
    return p.reshape(1, W)


def _group_matrix(D, pack, congruence):
    """(W, W) 0/1 matrix, hoisted constant: sums lanes within each group
    (block-diagonal, LayerNorm) or across groups per feature (congruence, BatchNorm)."""
    W = D * pack
    idx = np.arange(W)
    key = (idx % D) if congruence else (idx // D)
    return jnp.asarray((key[:, None] == key[None, :]).astype(np.float32))


# --------------------------------- LayerNorm --------------------------------
def _layernorm_kernel(x_ref, gamma_ref, beta_ref, *rest, D, pack):
    if pack > 1:
        grp_ref, o_ref = rest
    else:
        (o_ref,) = rest
    x = x_ref[...].astype(jnp.float32)                       # [tm, W]
    inv_d = 1.0 / D
    if pack > 1:
        grp = grp_ref[...]                                   # constant, DMA'd once
        # Two independent [tm,128]@[128,128] matmuls (raw moments) pipeline back-to-back.
        mean = jnp.dot(x, grp, preferred_element_type=jnp.float32) * inv_d
        ex2 = jnp.dot(x * x, grp, preferred_element_type=jnp.float32) * inv_d
    else:
        # Padded lanes are zero so the sums are exact; divide by the true D.
        mean = jnp.sum(x, axis=-1, keepdims=True) * inv_d
        ex2 = jnp.sum(x * x, axis=-1, keepdims=True) * inv_d
    var = jnp.maximum(ex2 - mean * mean, 0.0)
    inv = lax.rsqrt(var + EPS)
    o_ref[...] = ((x - mean) * (inv * gamma_ref[...]) + beta_ref[...]).astype(o_ref.dtype)


def _layernorm(x, gamma, beta):
    N, D = x.shape
    pack, W = _layout(D)
    Np = _cdiv(N, pack)
    vlim = _vmem_limit_bytes()
    tm = _tile_rows(Np, W, jnp.dtype(x.dtype).itemsize, vlim)
    x_p = _pack_input(x, pack, W, tm)
    Np_pad = x_p.shape[0]

    inputs = [x_p, _rep_param(gamma, pack, W), _rep_param(beta, pack, W)]
    in_specs = [
        pl.BlockSpec((tm, W), lambda i: (i, 0)),
        pl.BlockSpec((1, W), lambda i: (0, 0)),
        pl.BlockSpec((1, W), lambda i: (0, 0)),
    ]
    if pack > 1:
        inputs.append(_group_matrix(D, pack, congruence=False))
        in_specs.append(pl.BlockSpec((W, W), lambda i: (0, 0)))

    out = pl.pallas_call(
        functools.partial(_layernorm_kernel, D=D, pack=pack),
        out_shape=jax.ShapeDtypeStruct((Np_pad, W), x.dtype),
        grid=(Np_pad // tm,),
        in_specs=in_specs,
        out_specs=pl.BlockSpec((tm, W), lambda i: (i, 0)),
        compiler_params=pltpu.CompilerParams(
            dimension_semantics=("parallel",),
            vmem_limit_bytes=vlim,
        ),
    )(*inputs)
    return _unpack_output(out, N, D, pack)


# --------------------------------- BatchNorm --------------------------------
def _bn_fast_kernel(x_ref, gamma_ref, beta_ref, *rest, N, pack):
    """Whole-array-in-VMEM BatchNorm: stats + apply in one kernel (1 read + 1 write)."""
    if pack > 1:
        comb_ref, o_ref = rest
    else:
        (o_ref,) = rest
    x = x_ref[...].astype(jnp.float32)
    s1 = jnp.sum(x, axis=0, keepdims=True)          # padded rows/lanes are zero -> exact
    s2 = jnp.sum(x * x, axis=0, keepdims=True)
    if pack > 1:                                    # combine lane groups per feature (once)
        comb = comb_ref[...]
        s1 = jnp.dot(s1, comb, preferred_element_type=jnp.float32)
        s2 = jnp.dot(s2, comb, preferred_element_type=jnp.float32)
    mean = s1 * (1.0 / N)
    var = jnp.maximum(s2 * (1.0 / N) - mean * mean, 0.0)   # biased (training-mode) variance
    inv = lax.rsqrt(var + EPS)
    scale = inv * gamma_ref[...]
    shift = beta_ref[...] - mean * scale
    o_ref[...] = (x * scale + shift).astype(o_ref.dtype)


def _bn_moments_kernel(x_ref, mom_ref):
    """Per-shard raw per-lane moments, accumulated directly in the resident output block."""
    @pl.when(pl.program_id(1) == 0)
    def _init():
        mom_ref[...] = jnp.zeros_like(mom_ref)
    x = x_ref[...].astype(jnp.float32)              # padded rows are zero -> exact sums
    mom_ref[0:1, :] += jnp.sum(x, axis=0, keepdims=True)
    mom_ref[1:2, :] += jnp.sum(x * x, axis=0, keepdims=True)


def _bn_apply_kernel(x_ref, ss_ref, o_ref):
    x = x_ref[...].astype(jnp.float32)
    o_ref[...] = (x * ss_ref[0:1, :] + ss_ref[1:2, :]).astype(o_ref.dtype)


def _batchnorm(x, gamma, beta, *, force_tiled=False, max_tile_rows=None):
    # TODO(synk): running_mean / running_var buffers are not tracked (training-mode
    # batch statistics only, matching BatchNorm1d's default forward in train()).
    N, D = x.shape
    pack, W = _layout(D)
    Np = _cdiv(N, pack)
    itemsize = jnp.dtype(x.dtype).itemsize
    vlim = _vmem_limit_bytes()
    tm = _tile_rows(Np, W, itemsize, vlim, cap_rows=max_tile_rows)
    x_p = _pack_input(x, pack, W, tm)
    Np_pad = x_p.shape[0]

    f32_bytes = Np_pad * W * 4
    io_bytes = 2 * Np_pad * W * itemsize
    fast = (not force_tiled) and (io_bytes + 2 * f32_bytes <= vlim // 2)

    if fast:
        inputs = [x_p, _rep_param(gamma, pack, W), _rep_param(beta, pack, W)]
        if pack > 1:
            inputs.append(_group_matrix(D, pack, congruence=True))
        out = pl.pallas_call(
            functools.partial(_bn_fast_kernel, N=N, pack=pack),
            out_shape=jax.ShapeDtypeStruct((Np_pad, W), x.dtype),
            compiler_params=pltpu.CompilerParams(vmem_limit_bytes=vlim),
        )(*inputs)
        return _unpack_output(out, N, D, pack)

    # ---------------- Tiled path (large N): 2 reads + 1 write of x total ----------------
    n_tiles = Np_pad // tm
    num_shards = 2 if n_tiles >= 2 else 1           # megacore sharding of the stats pass
    tiles_per_shard = _cdiv(n_tiles, num_shards)
    rows_needed = num_shards * tiles_per_shard * tm
    if rows_needed != Np_pad:                        # extra zero rows are harmless for raw moments
        x_p = jnp.pad(x_p, ((0, rows_needed - Np_pad), (0, 0)))
        Np_pad = rows_needed
        n_tiles = Np_pad // tm

    # Pass A: per-shard raw moments (sum, sum-of-squares) per lane, single pass over x.
    moments = pl.pallas_call(
        _bn_moments_kernel,
        out_shape=jax.ShapeDtypeStruct((num_shards, 2, W), jnp.float32),
        grid=(num_shards, tiles_per_shard),
        in_specs=[pl.BlockSpec((tm, W),
                               lambda c, j: (c * tiles_per_shard + j, 0))],
        out_specs=pl.BlockSpec((None, 2, W), lambda c, j: (c, 0, 0)),
        compiler_params=pltpu.CompilerParams(
            dimension_semantics=("parallel", "arbitrary"),
            vmem_limit_bytes=vlim,
        ),
    )(x_p)

    # Tiny finalize in plain JAX: combine shards / lane groups, fold into scale & shift.
    mom = jnp.sum(moments, axis=0)                            # (2, W)
    cols = W // pack
    sum_x = jnp.sum(mom[0].reshape(pack, cols), axis=0)[:D]
    sum_x2 = jnp.sum(mom[1].reshape(pack, cols), axis=0)[:D]
    mean = sum_x / N
    var = jnp.maximum(sum_x2 / N - mean * mean, 0.0)          # biased (training-mode) variance
    inv = lax.rsqrt(var + EPS)
    scale = inv * gamma.astype(jnp.float32)
    shift = beta.astype(jnp.float32) - mean * scale
    scale_shift = jnp.concatenate(
        [_rep_param(scale, pack, W), _rep_param(shift, pack, W)], axis=0)   # (2, W)

    # Pass B: y = x * scale + shift, row-tiled, parallel across TensorCores.
    out = pl.pallas_call(
        _bn_apply_kernel,
        out_shape=jax.ShapeDtypeStruct((Np_pad, W), x.dtype),
        grid=(n_tiles,),
        in_specs=[
            pl.BlockSpec((tm, W), lambda i: (i, 0)),
            pl.BlockSpec((2, W), lambda i: (0, 0)),
        ],
        out_specs=pl.BlockSpec((tm, W), lambda i: (i, 0)),
        compiler_params=pltpu.CompilerParams(
            dimension_semantics=("parallel",),
            vmem_limit_bytes=vlim,
        ),
    )(x_p, scale_shift)
    return _unpack_output(out, N, D, pack)


# --------------------------------- public API -------------------------------
def normalize(x, gamma, beta, norm="batch"):
    """Forward pass of Normalize.  x: [N, D]; gamma, beta: [D]."""
    if norm == "none":
        return x
    if norm == "batch":
        return _batchnorm(x, gamma, beta)
    if norm == "layer":
        return _layernorm(x, gamma, beta)
    raise ValueError(f"unknown norm: {norm}")


# ----------------------------- reference (plain JAX) -------------------------
def _batchnorm_ref(x, gamma, beta):
    xf = x.astype(jnp.float32)
    mean = jnp.mean(xf, axis=0, keepdims=True)
    var = jnp.mean((xf - mean) ** 2, axis=0, keepdims=True)
    return ((xf - mean) / jnp.sqrt(var + EPS) * gamma + beta).astype(x.dtype)


def _layernorm_ref(x, gamma, beta):
    xf = x.astype(jnp.float32)
    mean = jnp.mean(xf, axis=-1, keepdims=True)
    var = jnp.mean((xf - mean) ** 2, axis=-1, keepdims=True)
    return ((xf - mean) / jnp.sqrt(var + EPS) * gamma + beta).astype(x.dtype)


if __name__ == "__main__":
    keys = jax.random.split(jax.random.PRNGKey(0), 6)

    # Small shapes matching the GNN usage: N nodes x D hidden features.
    N, D = 64, 32
    x = jax.random.normal(keys[0], (N, D), jnp.float32) * 2.0 + 0.5
    gamma = 1.0 + 0.1 * jax.random.normal(keys[1], (D,), jnp.float32)
    beta = 0.1 * jax.random.normal(keys[2], (D,), jnp.float32)

    # norm='batch' (the module default) -- exercises the VMEM-resident fast path.
    y_bn = normalize(x, gamma, beta, norm="batch")
    jax.block_until_ready(y_bn)
    assert jnp.allclose(y_bn, _batchnorm_ref(x, gamma, beta), atol=1e-4, rtol=1e-4), \
        "batchnorm mismatch"

    # norm='layer'
    y_ln = normalize(x, gamma, beta, norm="layer")
    jax.block_until_ready(y_ln)
    assert jnp.allclose(y_ln, _layernorm_ref(x, gamma, beta), atol=1e-4, rtol=1e-4), \
        "layernorm mismatch"

    # norm='none' (identity)
    y_id = normalize(x, gamma, beta, norm="none")
    jax.block_until_ready(y_id)
    assert jnp.array_equal(y_id, x)

    # Ragged row count (row-padding path).
    x2 = x[:50]
    assert jnp.allclose(normalize(x2, gamma, beta, "batch"),
                        _batchnorm_ref(x2, gamma, beta), atol=1e-4, rtol=1e-4), \
        "batchnorm (ragged) mismatch"
    assert jnp.allclose(normalize(x2, gamma, beta, "layer"),
                        _layernorm_ref(x2, gamma, beta), atol=1e-4, rtol=1e-4), \
        "layernorm (ragged) mismatch"

    # Feature width that does not divide 128 (lane-padding path, full-lane stores).
    D3 = 48
    x3 = jax.random.normal(keys[3], (40, D3), jnp.float32) - 0.3
    g3 = 1.0 + 0.1 * jax.random.normal(keys[4], (D3,), jnp.float32)
    b3 = 0.1 * jax.random.normal(keys[5], (D3,), jnp.float32)
    assert jnp.allclose(normalize(x3, g3, b3, "batch"),
                        _batchnorm_ref(x3, g3, b3), atol=1e-4, rtol=1e-4), \
        "batchnorm (padded D) mismatch"
    assert jnp.allclose(normalize(x3, g3, b3, "layer"),
                        _layernorm_ref(x3, g3, b3), atol=1e-4, rtol=1e-4), \
        "layernorm (padded D) mismatch"

    # Exercise the tiled BatchNorm path (multi-tile accumulation + core-sharded stats).
    x4 = jnp.tile(x, (16, 1))                      # (1024, 32)
    y4 = _batchnorm(x4, gamma, beta, force_tiled=True, max_tile_rows=96)
    jax.block_until_ready(y4)
    assert jnp.allclose(y4, _batchnorm_ref(x4, gamma, beta), atol=1e-4, rtol=1e-4), \
        "batchnorm (tiled) mismatch"

    print("KERNEL_OK")
</pallas_src>

<mosaic_0001>
module attributes {stable_mosaic.version = 11 : i64} {
  func.func @_bn_fast_kernel(%arg0: memref<16x128xf32, #tpu.memory_space<vmem>>, %arg1: memref<1x128xf32, #tpu.memory_space<vmem>>, %arg2: memref<1x128xf32, #tpu.memory_space<vmem>>, %arg3: memref<128x128xf32, #tpu.memory_space<vmem>>, %arg4: memref<16x128xf32, #tpu.memory_space<vmem>>) attributes {dimension_semantics = [], scalar_prefetch = 0 : i64, scratch_operands = 0 : i64, tpu.core_type = #tpu.core_type<tc>} {
    %c0 = arith.constant 0 : index
    %c0_0 = arith.constant 0 : index
    %0 = vector.load %arg0[%c0, %c0_0] : memref<16x128xf32, #tpu.memory_space<vmem>>, vector<16x128xf32>
    %cst = arith.constant dense<0.000000e+00> : vector<128xf32>
    %1 = vector.multi_reduction <add>, %0, %cst [0] : vector<16x128xf32> to vector<128xf32>
    %2 = vector.shape_cast %1 : vector<128xf32> to vector<1x128xf32>
    %3 = arith.mulf %0, %0 : vector<16x128xf32>
    %cst_1 = arith.constant dense<0.000000e+00> : vector<128xf32>
    %4 = vector.multi_reduction <add>, %3, %cst_1 [0] : vector<16x128xf32> to vector<128xf32>
    %5 = vector.shape_cast %4 : vector<128xf32> to vector<1x128xf32>
    %c0_2 = arith.constant 0 : index
    %c0_3 = arith.constant 0 : index
    %6 = vector.load %arg3[%c0_2, %c0_3] : memref<128x128xf32, #tpu.memory_space<vmem>>, vector<128x128xf32>
    %cst_4 = arith.constant dense<0.000000e+00> : vector<1x128xf32>
    %7 = tpu.matmul %2, %6, %cst_4 {dimension_numbers = #tpu.dot_dimension_numbers<[1], [0], [0], [1], [0, 0, 1, 1], [], []>} : vector<1x128xf32>, vector<128x128xf32>, vector<1x128xf32> -> vector<1x128xf32>
    %cst_5 = arith.constant dense<0.000000e+00> : vector<1x128xf32>
    %8 = tpu.matmul %5, %6, %cst_5 {dimension_numbers = #tpu.dot_dimension_numbers<[1], [0], [0], [1], [0, 0, 1, 1], [], []>} : vector<1x128xf32>, vector<128x128xf32>, vector<1x128xf32> -> vector<1x128xf32>
    %cst_6 = arith.constant 1.562500e-02 : f32
    %9 = vector.broadcast %cst_6 : f32 to vector<1x128xf32>
    %10 = arith.mulf %7, %9 : vector<1x128xf32>
    %cst_7 = arith.constant 1.562500e-02 : f32
    %11 = vector.broadcast %cst_7 : f32 to vector<1x128xf32>
    %12 = arith.mulf %8, %11 : vector<1x128xf32>
    %13 = arith.mulf %10, %10 : vector<1x128xf32>
    %14 = arith.subf %12, %13 : vector<1x128xf32>
    %cst_8 = arith.constant 0.000000e+00 : f32
    %15 = vector.broadcast %cst_8 : f32 to vector<1x128xf32>
    %16 = arith.maximumf %14, %15 : vector<1x128xf32>
    %cst_9 = arith.constant 9.99999974E-6 : f32
    %17 = vector.broadcast %cst_9 : f32 to vector<1x128xf32>
    %18 = arith.addf %16, %17 : vector<1x128xf32>
    %19 = math.rsqrt %18 : vector<1x128xf32>
    %c0_10 = arith.constant 0 : index
    %c0_11 = arith.constant 0 : index
    %20 = vector.load %arg1[%c0_10, %c0_11] : memref<1x128xf32, #tpu.memory_space<vmem>>, vector<1x128xf32>
    %21 = arith.mulf %19, %20 : vector<1x128xf32>
    %c0_12 = arith.constant 0 : index
    %c0_13 = arith.constant 0 : index
    %22 = vector.load %arg2[%c0_12, %c0_13] : memref<1x128xf32, #tpu.memory_space<vmem>>, vector<1x128xf32>
    %23 = arith.mulf %10, %21 : vector<1x128xf32>
    %24 = arith.subf %22, %23 : vector<1x128xf32>
    %25 = vector.broadcast %21 : vector<1x128xf32> to vector<16x128xf32>
    %26 = arith.mulf %0, %25 : vector<16x128xf32>
    %27 = vector.broadcast %24 : vector<1x128xf32> to vector<16x128xf32>
    %28 = arith.addf %26, %27 : vector<16x128xf32>
    %c0_14 = arith.constant 0 : index
    %c0_15 = arith.constant 0 : index
    %29 = vector.load %arg4[%c0_14, %c0_15] : memref<16x128xf32, #tpu.memory_space<vmem>>, vector<16x128xf32>
    tpu.vector_store %arg4[%c0_14, %c0_15], %28 {strides = array<i32>} : memref<16x128xf32, #tpu.memory_space<vmem>>, vector<16x128xf32>,
    return
  }
}

</mosaic_0001>

<llo_original>
// kernel: tpu_custom_call.1
$region0: #{tpu_custom_call.1}
  #allocation0 [shape = 'u32[]', space=smem, size = 0x4, offset = 0x4, fixed_abs, tag = 'smem constant byte address 0x4 - core index']
  #allocation1 [shape = 'u32[144,128]{1,0:T(1,128)}', space=vmem, size = 0x12000, scoped, tag = 'internal scratch']
  %s0 = inlined_call_operand.hbm [shape: f32[16,128], index: 0, kind: input, shape index: {}]
  %s1 = inlined_call_operand.vmem [shape: f32[1,128], index: 1, kind: input, shape index: {}]
  %s2 = inlined_call_operand.vmem [shape: f32[1,128], index: 2, kind: input, shape index: {}]
  %s3 = inlined_call_operand.hbm [shape: f32[128,128], index: 3, kind: input, shape index: {}]
  %s4 = inlined_call_operand.hbm [shape: f32[16,128], index: 4, kind: output, shape index: {}]
  %s5 = sld [smem:[#allocation0]]
  $region34: #{tpu_custom_call.1} parent=0
    _
  %s7 = ssub.s32 1, %s5
  %s8 = scalar_select 0, %s7, %s5
  $region1: #{tpu_custom_call.1} parent=0
    #allocation2 [shape = 'u8[8192]{0}', space=vmem, size = 0x2000, scoped, tag = 'input window, operand 0, single buffered']
    #allocation3 [shape = 's32[1]{0}', space=sflag, size = 0x4, scoped, tag = 'scoped memory for tpu_custom_call.1']
    #allocation4 [shape = 's32[1]{0}', space=sflag, size = 0x4, scoped, tag = 'scoped memory for tpu_custom_call.1']
    #allocation5 [shape = 'u8[65536]{0}', space=vmem, size = 0x10000, scoped, tag = 'input window, operand 3, single buffered']
    #allocation6 [shape = 's32[1]{0}', space=sflag, size = 0x4, scoped, tag = 'scoped memory for tpu_custom_call.1']
    #allocation7 [shape = 'u8[8192]{0}', space=vmem, size = 0x2000, scoped, tag = 'output window, operand 0, single buffered']
    %9 = vsyncpa [#allocation3], 0
    %10 = vsyncpa [#allocation6], 0
    %11 = vsyncpa [#allocation4], 0
    // Predicated region
    $region2: #{tpu_custom_call.1} parent=1 // pred_check
      _
    $region3: #{tpu_custom_call.1} parent=1 // pred_check_branch
      %13 = sbr.rel (0) target = $region5
    $region4: #{tpu_custom_call.1} parent=1 // pred_region
      %s15 = ssub.s32 256, 256
      %16 = vsyncadd [#allocation3], %s15
      %s17 = sshll.u32 [#allocation2], 4
      %s18 = int_to_ptr.vmem [resolvable:$true] %s17
      %23 = dma.hbm_to_vmem [thread:$0]  %s0, 256, %s18, [#allocation3], 128, 128, 8
    $region5: #{tpu_custom_call.1} parent=1 // pred_fallthru
      _
    // Predicated region
    $region6: #{tpu_custom_call.1} parent=1 // pred_check
      _
    $region7: #{tpu_custom_call.1} parent=1 // pred_check_branch
      %25 = sbr.rel (0) target = $region9
    $region8: #{tpu_custom_call.1} parent=1 // pred_region
      _
    $region9: #{tpu_custom_call.1} parent=1 // pred_fallthru
      _
    // Predicated region
    $region10: #{tpu_custom_call.1} parent=1 // pred_check
      _
    $region11: #{tpu_custom_call.1} parent=1 // pred_check_branch
      %27 = sbr.rel (0) target = $region13
    $region12: #{tpu_custom_call.1} parent=1 // pred_region
      _
    $region13: #{tpu_custom_call.1} parent=1 // pred_fallthru
      _
    // Predicated region
    $region14: #{tpu_custom_call.1} parent=1 // pred_check
      _
    $region15: #{tpu_custom_call.1} parent=1 // pred_check_branch
      %29 = sbr.rel (0) target = $region17
    $region16: #{tpu_custom_call.1} parent=1 // pred_region
      %s31 = ssub.s32 2048, 2048
      %32 = vsyncadd [#allocation6], %s31
      %s33 = sshll.u32 [#allocation5], 4
      %s34 = int_to_ptr.vmem [resolvable:$true] %s33
      %39 = dma.hbm_to_vmem [thread:$0]  %s3, 2048, %s34, [#allocation6], 128, 128, 8
    $region17: #{tpu_custom_call.1} parent=1 // pred_fallthru
      _
    // Predicated region
    $region18: #{tpu_custom_call.1} parent=1 // pred_check
      _
    $region19: #{tpu_custom_call.1} parent=1 // pred_check_branch
      %41 = sbr.rel (0) target = $region21
    $region20: #{tpu_custom_call.1} parent=1 // pred_region
      %42 = dma.done [#allocation3], 256
    $region21: #{tpu_custom_call.1} parent=1 // pred_fallthru
      _
    // Predicated region
    $region22: #{tpu_custom_call.1} parent=1 // pred_check
      _
    $region23: #{tpu_custom_call.1} parent=1 // pred_check_branch
      %44 = sbr.rel (0) target = $region25
    $region24: #{tpu_custom_call.1} parent=1 // pred_region
      %45 = dma.done [#allocation6], 2048
    $region25: #{tpu_custom_call.1} parent=1 // pred_fallthru
      _
    %v46 = vld [vmem:[#allocation2] sm:$0xff]
    %v47 = vld [vmem:[#allocation2 + $0x8] sm:$0xff]
    %v48 = vadd.f32 %v46, %v47
    %v49 = vrot.slane %v48, 4
    %v50 = vadd.f32 %v48, %v49
    %v51 = vrot.slane %v50, 2
    %v52 = vadd.f32 %v50, %v51
    %v53 = vrot.slane %v52, 1
    %v54 = vadd.f32 %v52, %v53
    %v55 = vmul.f32 %v46, %v46
    %v56 = vmul.f32 %v47, %v47
    %v57 = vadd.f32 %v55, %v56
    %v58 = vrot.slane %v57, 4
    %v59 = vadd.f32 %v57, %v58
    %v60 = vrot.slane %v59, 2
    %v61 = vadd.f32 %v59, %v60
    %v62 = vrot.slane %v61, 1
    %v63 = vadd.f32 %v61, %v62
    %v64 = vld [vmem:[#allocation5] sm:$0xff]
    %v65 = vld [vmem:[#allocation5 + $0x8] sm:$0xff]
    %v66 = vld [vmem:[#allocation5 + $0x10] sm:$0xff]
    %v67 = vld [vmem:[#allocation5 + $0x18] sm:$0xff]
    %v68 = vld [vmem:[#allocation5 + $0x20] sm:$0xff]
    %v69 = vld [vmem:[#allocation5 + $0x28] sm:$0xff]
    %v70 = vld [vmem:[#allocation5 + $0x30] sm:$0xff]
    %v71 = vld [vmem:[#allocation5 + $0x38] sm:$0xff]
    %v72 = vld [vmem:[#allocation5 + $0x40] sm:$0xff]
    %v73 = vld [vmem:[#allocation5 + $0x48] sm:$0xff]
    %v74 = vld [vmem:[#allocation5 + $0x50] sm:$0xff]
    %v75 = vld [vmem:[#allocation5 + $0x58] sm:$0xff]
    %v76 = vld [vmem:[#allocation5 + $0x60] sm:$0xff]
    %v77 = vld [vmem:[#allocation5 + $0x68] sm:$0xff]
    %v78 = vld [vmem:[#allocation5 + $0x70] sm:$0xff]
    %v79 = vld [vmem:[#allocation5 + $0x78] sm:$0xff]
    %80 = vmatprep.subr.mxu0 0.0
    %81 = vmatpush1.msra.mxu0 %v64
    %82 = vmatprep.subr.mxu0 0.0
    %83 = vmatpush1.msra.mxu0 %v65
    %84 = vmatprep.subr.mxu0 0.0
    %85 = vmatpush1.msra.mxu0 %v66
    %86 = vmatprep.subr.mxu0 0.0
    %87 = vmatpush1.msra.mxu0 %v67
    %88 = vmatprep.subr.mxu0 0.0
    %89 = vmatpush1.msra.mxu0 %v68
    %90 = vmatprep.subr.mxu0 0.0
    %91 = vmatpush1.msra.mxu0 %v69
    %92 = vmatprep.subr.mxu0 0.0
    %93 = vmatpush1.msra.mxu0 %v70
    %94 = vmatprep.subr.mxu0 0.0
    %95 = vmatpush1.msra.mxu0 %v71
    %96 = vmatprep.subr.mxu0 0.0
    %97 = vmatpush1.msra.mxu0 %v72
    %98 = vmatprep.subr.mxu0 0.0
    %99 = vmatpush1.msra.mxu0 %v73
    %100 = vmatprep.subr.mxu0 0.0
    %101 = vmatpush1.msra.mxu0 %v74
    %102 = vmatprep.subr.mxu0 0.0
    %103 = vmatpush1.msra.mxu0 %v75
    %104 = vmatprep.subr.mxu0 0.0
    %105 = vmatpush1.msra.mxu0 %v76
    %106 = vmatprep.subr.mxu0 0.0
    %107 = vmatpush1.msra.mxu0 %v77
    %108 = vmatprep.subr.mxu0 0.0
    %109 = vmatpush1.msra.mxu0 %v78
    %110 = vmatprep.subr.mxu0 0.0
    %111 = vmatpush1.msra.mxu0 %v79
    %112 = vmatprep.subr.mxu0 0.0
    %113 = vmatpush1.msra.mxu0 0.0
    %114 = vmatprep.subr.mxu0 0.0
    %115 = vmatpush1.msra.mxu0 0.0
    %116 = vmatprep.subr.mxu0 0.0
    %117 = vmatpush1.msra.mxu0 0.0
    %118 = vmatprep.subr.mxu0 0.0
    %119 = vmatpush1.msra.mxu0 0.0
    %120 = vmatprep.subr.mxu0 0.0
    %121 = vmatpush1.msra.mxu0 0.0
    %122 = vmatprep.subr.mxu0 0.0
    %123 = vmatpush1.msra.mxu0 0.0
    %124 = vmatprep.subr.mxu0 0.0
    %125 = vmatpush1.msra.mxu0 0.0
    %126 = vmatprep.subr.mxu0 0.0
    %127 = vmatpush1.msra.mxu0 0.0
    %128 = vmatprep.subr.mxu0 0.0
    %129 = vmatpush1.msra.mxu0 0.0
    %130 = vmatprep.subr.mxu0 0.0
    %131 = vmatpush1.msra.mxu0 0.0
    %132 = vmatprep.subr.mxu0 0.0
    %133 = vmatpush1.msra.mxu0 0.0
    %134 = vmatprep.subr.mxu0 0.0
    %135 = vmatpush1.msra.mxu0 0.0
    %136 = vmatprep.subr.mxu0 0.0
    %137 = vmatpush1.msra.mxu0 0.0
    %138 = vmatprep.subr.mxu0 0.0
    %139 = vmatpush1.msra.mxu0 0.0
    %140 = vmatprep.subr.mxu0 0.0
    %141 = vmatpush1.msra.mxu0 0.0
    %142 = vmatprep.subr.mxu0 0.0
    %143 = vmatpush1.msra.mxu0 0.0
    %144 = vmatprep.mubr.f32.mxu0 0.0
    %145 = vmatmul.mubr.f32.gmra.mrb[0].mxu0 %v54
    %v146 = vpop.f32.mrb[0].mxu0
    %v147 = vadd.f32 0.0, %v146
    %v148 = vpop.f32.mrb[0].mxu0
    %149 = vdwg.mxu0
    %150 = vmatprep.subr.mxu0 0.0
    %151 = vmatpush1.msra.mxu0 %v64
    %152 = vmatprep.subr.mxu0 0.0
    %153 = vmatpush1.msra.mxu0 %v65
    %154 = vmatprep.subr.mxu0 0.0
    %155 = vmatpush1.msra.mxu0 %v66
    %156 = vmatprep.subr.mxu0 0.0
    %157 = vmatpush1.msra.mxu0 %v67
    %158 = vmatprep.subr.mxu0 0.0
    %159 = vmatpush1.msra.mxu0 %v68
    %160 = vmatprep.subr.mxu0 0.0
    %161 = vmatpush1.msra.mxu0 %v69
    %162 = vmatprep.subr.mxu0 0.0
    %163 = vmatpush1.msra.mxu0 %v70
    %164 = vmatprep.subr.mxu0 0.0
    %165 = vmatpush1.msra.mxu0 %v71
    %166 = vmatprep.subr.mxu0 0.0
    %167 = vmatpush1.msra.mxu0 %v72
    %168 = vmatprep.subr.mxu0 0.0
    %169 = vmatpush1.msra.mxu0 %v73
    %170 = vmatprep.subr.mxu0 0.0
    %171 = vmatpush1.msra.mxu0 %v74
    %172 = vmatprep.subr.mxu0 0.0
    %173 = vmatpush1.msra.mxu0 %v75
    %174 = vmatprep.subr.mxu0 0.0
    %175 = vmatpush1.msra.mxu0 %v76
    %176 = vmatprep.subr.mxu0 0.0
    %177 = vmatpush1.msra.mxu0 %v77
    %178 = vmatprep.subr.mxu0 0.0
    %179 = vmatpush1.msra.mxu0 %v78
    %180 = vmatprep.subr.mxu0 0.0
    %181 = vmatpush1.msra.mxu0 %v79
    %182 = vmatprep.subr.mxu0 0.0
    %183 = vmatpush1.msra.mxu0 0.0
    %184 = vmatprep.subr.mxu0 0.0
    %185 = vmatpush1.msra.mxu0 0.0
    %186 = vmatprep.subr.mxu0 0.0
    %187 = vmatpush1.msra.mxu0 0.0
    %188 = vmatprep.subr.mxu0 0.0
    %189 = vmatpush1.msra.mxu0 0.0
    %190 = vmatprep.subr.mxu0 0.0
    %191 = vmatpush1.msra.mxu0 0.0
    %192 = vmatprep.subr.mxu0 0.0
    %193 = vmatpush1.msra.mxu0 0.0
    %194 = vmatprep.subr.mxu0 0.0
    %195 = vmatpush1.msra.mxu0 0.0
    %196 = vmatprep.subr.mxu0 0.0
    %197 = vmatpush1.msra.mxu0 0.0
    %198 = vmatprep.subr.mxu0 0.0
    %199 = vmatpush1.msra.mxu0 0.0
    %200 = vmatprep.subr.mxu0 0.0
    %201 = vmatpush1.msra.mxu0 0.0
    %202 = vmatprep.subr.mxu0 0.0
    %203 = vmatpush1.msra.mxu0 0.0
    %204 = vmatprep.subr.mxu0 0.0
    %205 = vmatpush1.msra.mxu0 0.0
    %206 = vmatprep.subr.mxu0 0.0
    %207 = vmatpush1.msra.mxu0 0.0
    %208 = vmatprep.subr.mxu0 0.0
    %209 = vmatpush1.msra.mxu0 0.0
    %210 = vmatprep.subr.mxu0 0.0
    %211 = vmatpush1.msra.mxu0 0.0
    %212 = vmatprep.subr.mxu0 0.0
    %213 = vmatpush1.msra.mxu0 0.0
    %214 = vmatprep.mubr.f32.mxu0 0.0
    %215 = vmatmul.mubr.f32.gmra.mrb[0].mxu0 %v63
    %v216 = vpop.f32.mrb[0].mxu0
    %v217 = vadd.f32 0.0, %v216
    %v218 = vpop.f32.mrb[0].mxu0
    %219 = vdwg.mxu0
    %v220 = vmul.f32 %v147, 0.015625
    %v221 = vmul.f32 %v217, 0.015625
    %v222 = vmul.f32 %v220, %v220
    %v223 = vsub.f32 %v221, %v222
    %v224 = vmax.f32 %v223, 0.0
    %v225 = vadd.f32 %v224, 1e-05
    %v226 = vrsqrt.pop %v225
    %v227 = vld [vmem:[%s1] sm:$0x1]
    %v228 = vmul.f32 %v226, %v227
    %v229 = vld [vmem:[%s2] sm:$0x1]
    %v230 = vmul.f32 %v220, %v228
    %v231 = vsub.f32 %v229, %v230
    %v232 = vlaneseq
    %v233 = vshrl.u32 %v232, 7
    %v234 = vsub.s32 0, %v233
    %v235 = vrot.slane %v228, %v234
    %v236 = vmul.f32 %v46, %v235
    %v237 = vmul.f32 %v47, %v235
    %v239 = vlaneseq
    %v240 = vshrl.u32 %v239, 7
    %v241 = vsub.s32 0, %v240
    %v242 = vrot.slane %v231, %v241
    %v244 = vadd.f32 %v236, %v242
    %v245 = vadd.f32 %v237, %v242
    %246 = vst [vmem:[#allocation7] sm:$0xff] %v244
    %247 = vst [vmem:[#allocation7 + $0x8] sm:$0xff] %v245
    // Predicated region
    $region26: #{tpu_custom_call.1} parent=1 // pred_check
      _
    $region27: #{tpu_custom_call.1} parent=1 // pred_check_branch
      %249 = sbr.rel (0) target = $region29
    $region28: #{tpu_custom_call.1} parent=1 // pred_region
      %s251 = ssub.s32 256, 256
      %252 = vsyncadd [#allocation4], %s251
      %s253 = sshll.u32 [#allocation7], 4
      %s254 = int_to_ptr.vmem [resolvable:$true] %s253
      %259 = dma.vmem_to_hbm [thread:$0]  %s254, 256, %s4, [#allocation4], 128, 128, 8
    $region29: #{tpu_custom_call.1} parent=1 // pred_fallthru
      _
    // Predicated region
    $region30: #{tpu_custom_call.1} parent=1 // pred_check
      _
    $region31: #{tpu_custom_call.1} parent=1 // pred_check_branch
      %261 = sbr.rel (0) target = $region33
    $region32: #{tpu_custom_call.1} parent=1 // pred_region
      %262 = dma.done [#allocation4], 256
    $region33: #{tpu_custom_call.1} parent=1 // pred_fallthru
      _
    %263 = vsyncpa [#allocation3], 1
    %264 = vsyncpa [#allocation6], 1
    %265 = vsyncpa [#allocation4], 1

</llo_original>
